<compile_context>
chip_gen: v6e
topology: v6e:2x2x1
jax: 0.10.0
libtpu: 0.0.40
codegen_flags: <defaults>
</compile_context>

<pallas_src>
import functools
import math

import jax
import jax.numpy as jnp
import numpy as np
from jax.experimental import pallas as pl
from jax.experimental.pallas import tpu as pltpu


def _round_up(x, m):
    return ((x + m - 1) // m) * m


def _make_positional_encoding(max_seq_len, d_emb):
    """Same construction as the PyTorch module (sin on even, cos on odd dims)."""
    pe = np.zeros((max_seq_len, d_emb), dtype=np.float32)
    position = np.arange(0, max_seq_len, dtype=np.float32)[:, None]
    div_term = np.exp(np.arange(0, d_emb, 2, dtype=np.float32)
                      * (-math.log(10000.0) / d_emb))
    pe[:, 0::2] = np.sin(position * div_term)
    pe[:, 1::2] = np.cos(position * div_term)
    return jnp.asarray(pe)


# ----------------------------------------------------------------------------
# Fast path: whole (padded) table resident in VMEM, one-hot MXU selection.
# Grid = (seq_tiles, batch); table BlockSpec index is constant -> DMA'd once.
# ----------------------------------------------------------------------------
def _onehot_kernel(idx_ref, pos_ref, table_ref, out_ref, *, vocab):
    """
    idx_ref   : VMEM int32 [1, St, 1]      token ids for this (b, s) block
    pos_ref   : VMEM f32   [St, D_pad]     positional rows for this seq tile
    table_ref : VMEM       [V_pad, D_pad]  full padded table (resident)
    out_ref   : VMEM       [1, St, D_pad]
    """
    ids = jnp.clip(idx_ref[0], 0, vocab - 1)            # (St, 1) int32
    st = ids.shape[0]
    vp = table_ref.shape[0]
    col = jax.lax.broadcasted_iota(jnp.int32, (st, vp), 1)
    one_hot = (col == ids).astype(table_ref.dtype)       # exact 0/1, native dtype
    emb = jnp.dot(one_hot, table_ref[...],
                  preferred_element_type=jnp.float32)     # (St, D_pad) f32
    out_ref[...] = (emb + pos_ref[...]).astype(out_ref.dtype)[None]


# ----------------------------------------------------------------------------
# Large-vocab path: table stays in HBM; per-row manual DMA gather driven by
# token ids scalar-prefetched into SMEM.
# ----------------------------------------------------------------------------
def _gather_kernel(idx_ref, pos_ref, table_ref, out_ref, gbuf, sem, *, vocab):
    """
    idx_ref   : SMEM int32 [B, S_pad]      all token ids (scalar prefetch)
    pos_ref   : VMEM f32   [St, D_pad]     positional rows for this seq tile
    table_ref : HBM        [V, D_pad]      full table (memory_space=pl.ANY)
    out_ref   : VMEM       [1, St, D_pad]
    gbuf      : VMEM       [St, D_pad]     gathered embedding rows (table dtype)
    sem       : DMA semaphore
    """
    s = pl.program_id(0)
    b = pl.program_id(1)
    st = gbuf.shape[0]
    base = s * st

    def _issue(i, carry):
        tok = jnp.clip(idx_ref[b, base + i], 0, vocab - 1)
        pltpu.make_async_copy(table_ref.at[pl.ds(tok, 1)],
                              gbuf.at[pl.ds(i, 1)], sem).start()
        return carry

    jax.lax.fori_loop(0, st, _issue, 0)

    def _drain(i, carry):
        # wait() only depends on the dst slice size; all row copies are equal.
        pltpu.make_async_copy(table_ref.at[pl.ds(0, 1)],
                              gbuf.at[pl.ds(i, 1)], sem).wait()
        return carry

    jax.lax.fori_loop(0, st, _drain, 0)

    emb = gbuf[...].astype(jnp.float32)                   # (St, D_pad)
    out_ref[...] = (emb + pos_ref[...]).astype(out_ref.dtype)[None]


class PallasEmbedder:
    """JAX/Pallas equivalent of the PyTorch `Embedder` forward pass."""

    def __init__(self, glove_vectors, pad_idx=0, dropout_rate=0.0,
                 max_seq_len=100, *, seq_tile=256, force_path="auto",
                 fast_path_table_bytes=4 << 20):
        glove_vectors = jnp.asarray(glove_vectors)
        V, D = glove_vectors.shape
        self.V, self.D = V, D
        self.D_pad = _round_up(D, 128)
        self.pad_idx = pad_idx                    # kept for API parity; lookup keeps pad row
        self.dropout_rate = dropout_rate          # identity at inference (eval mode)
        self.max_seq_len = max_seq_len
        self.seq_tile = seq_tile
        self.table_dtype = glove_vectors.dtype
        self.out_dtype = jnp.promote_types(glove_vectors.dtype, jnp.float32)

        # Positional encoding, padded once to D_pad (hoisted out of forward).
        pe = _make_positional_encoding(max_seq_len, D)
        self.pos = jnp.pad(pe, ((0, 0), (0, self.D_pad - D)))

        # Generation-aware fast-path budget (v7x has 64 MiB VMEM vs 128 MiB).
        try:
            vmem_bytes = pltpu.get_tpu_info().vmem_capacity_bytes
        except Exception:
            vmem_bytes = 64 << 20
        fast_budget = min(fast_path_table_bytes, vmem_bytes // 8)

        itemsize = np.dtype(self.table_dtype).itemsize
        V_pad128 = _round_up(V, 128)
        table_bytes = V_pad128 * self.D_pad * itemsize

        if force_path == "onehot" or (force_path == "auto"
                                      and table_bytes <= fast_budget):
            self.path = "onehot"
            self.V_pad = V_pad128
            # Pad once at init; native dtype kept (no forced f32 cast).
            self.table = jnp.pad(glove_vectors,
                                 ((0, V_pad128 - V), (0, self.D_pad - D)))
        else:
            self.path = "gather"
            self.table = jnp.pad(glove_vectors, ((0, 0), (0, self.D_pad - D)))

    def __call__(self, x):
        """x: int [B, S] -> float [B, S, D] = table[x] + pos[:S]  (eval dropout)."""
        B, S = x.shape
        if S > self.max_seq_len:
            raise ValueError("sequence length exceeds max_seq_len")
        D, D_pad = self.D, self.D_pad

        St = min(self.seq_tile, _round_up(S, 8))
        S_pad = _round_up(S, St)

        idx = x.astype(jnp.int32)
        if S_pad != S:
            idx = jnp.pad(idx, ((0, 0), (0, S_pad - S)))     # pad ids -> row 0 (sliced off)

        pos_p = self.pos[:S]
        if S_pad != S:
            pos_p = jnp.pad(pos_p, ((0, S_pad - S), (0, 0)))

        grid = (S_pad // St, B)   # batch innermost -> pos block stays resident
        out_shape = jax.ShapeDtypeStruct((B, S_pad, D_pad), self.out_dtype)
        cparams = pltpu.CompilerParams(
            dimension_semantics=("parallel", "parallel"))

        if self.path == "onehot":
            idx3 = idx.reshape(B, S_pad, 1)
            kernel = functools.partial(_onehot_kernel, vocab=self.V)
            out = pl.pallas_call(
                kernel,
                out_shape=out_shape,
                grid_spec=pltpu.PrefetchScalarGridSpec(
                    num_scalar_prefetch=0,
                    grid=grid,
                    in_specs=[
                        pl.BlockSpec((1, St, 1), lambda s, b: (b, s, 0)),
                        pl.BlockSpec((St, D_pad), lambda s, b: (s, 0)),
                        # constant block index -> table DMA'd once, resident
                        pl.BlockSpec((self.V_pad, D_pad), lambda s, b: (0, 0)),
                    ],
                    out_specs=pl.BlockSpec((1, St, D_pad),
                                           lambda s, b: (b, s, 0)),
                ),
                compiler_params=cparams,
            )(idx3, pos_p, self.table)
        else:
            kernel = functools.partial(_gather_kernel, vocab=self.V)
            out = pl.pallas_call(
                kernel,
                out_shape=out_shape,
                grid_spec=pltpu.PrefetchScalarGridSpec(
                    num_scalar_prefetch=1,            # token ids -> SMEM
                    grid=grid,
                    in_specs=[
                        pl.BlockSpec((St, D_pad), lambda s, b, idx: (s, 0)),
                        pl.BlockSpec(memory_space=pl.ANY),   # table stays in HBM
                    ],
                    out_specs=pl.BlockSpec((1, St, D_pad),
                                           lambda s, b, idx: (b, s, 0)),
                    scratch_shapes=[
                        pltpu.VMEM((St, D_pad), self.table.dtype),
                        pltpu.SemaphoreType.DMA,
                    ],
                ),
                compiler_params=cparams,
            )(idx, pos_p, self.table)

        if S_pad == S and D_pad == D:
            return out                      # aligned: no extra HBM pass
        return out[:, :S, :D]


if __name__ == "__main__":
    key = jax.random.PRNGKey(0)
    k1, k2, k3, k4 = jax.random.split(key, 4)
    MAX_SEQ_LEN = 100

    # --- Test 1: small vocab -> resident-table one-hot fast path -------------
    B, S, V, D = 2, 8, 64, 32
    glove = jax.random.normal(k1, (V, D), dtype=jnp.float32)
    x = jax.random.randint(k2, (B, S), 0, V, dtype=jnp.int32)

    embedder = PallasEmbedder(glove, pad_idx=0, dropout_rate=0.1,
                              max_seq_len=MAX_SEQ_LEN)
    out = jax.block_until_ready(embedder(x))

    pos_full = _make_positional_encoding(MAX_SEQ_LEN, D)
    ref = jnp.take(glove, x, axis=0) + pos_full[None, :S, :]
    np.testing.assert_allclose(np.asarray(out), np.asarray(ref),
                               rtol=1e-5, atol=1e-5)

    # --- Test 2: force the large-vocab manual-DMA gather path ----------------
    B2, S2, V2, D2 = 2, 16, 512, 64
    glove2 = jax.random.normal(k3, (V2, D2), dtype=jnp.float32)
    x2 = jax.random.randint(k4, (B2, S2), 0, V2, dtype=jnp.int32)

    embedder2 = PallasEmbedder(glove2, pad_idx=0, dropout_rate=0.1,
                               max_seq_len=MAX_SEQ_LEN, force_path="gather")
    out2 = jax.block_until_ready(embedder2(x2))

    pos_full2 = _make_positional_encoding(MAX_SEQ_LEN, D2)
    ref2 = jnp.take(glove2, x2, axis=0) + pos_full2[None, :S2, :]
    np.testing.assert_allclose(np.asarray(out2), np.asarray(ref2),
                               rtol=1e-5, atol=1e-5)

    print("KERNEL_OK")
</pallas_src>

<mosaic_0001>
module attributes {stable_mosaic.version = 11 : i64} {
  func.func @_onehot_kernel(%arg0: i32, %arg1: i32, %arg2: memref<1x8x1xi32, #tpu.memory_space<vmem>>, %arg3: memref<8x128xf32, #tpu.memory_space<vmem>>, %arg4: memref<128x128xf32, #tpu.memory_space<vmem>>, %arg5: memref<1x8x128xf32, #tpu.memory_space<vmem>>) attributes {dimension_semantics = [#tpu.dimension_semantics<parallel>, #tpu.dimension_semantics<parallel>], iteration_bounds = array<i64: 1, 2>, scalar_prefetch = 0 : i64, scratch_operands = 0 : i64, tpu.core_type = #tpu.core_type<tc>, window_params = [{transform_indices = @transform_0, window_bounds = array<i64: 1, 8, 1>}, {transform_indices = @transform_1, window_bounds = array<i64: 8, 128>}, {pipeline_mode = #tpu.pipeline_mode<synchronous>, transform_indices = @transform_2, window_bounds = array<i64: 128, 128>}, {transform_indices = @transform_3, window_bounds = array<i64: 1, 8, 128>}]} {
    %c0 = arith.constant 0 : index
    %c0_0 = arith.constant 0 : index
    %c0_1 = arith.constant 0 : index
    %0 = vector.load %arg2[%c0, %c0_0, %c0_1] : memref<1x8x1xi32, #tpu.memory_space<vmem>>, vector<1x8x1xi32>
    %1 = vector.shape_cast %0 : vector<1x8x1xi32> to vector<8x1xi32>
    %c0_i32 = arith.constant 0 : i32
    %c63_i32 = arith.constant 63 : i32
    %2 = vector.broadcast %c0_i32 : i32 to vector<8x1xi32>
    %3 = arith.maxsi %2, %1 : vector<8x1xi32>
    %4 = vector.broadcast %c63_i32 : i32 to vector<8x1xi32>
    %5 = arith.minsi %4, %3 : vector<8x1xi32>
    %6 = tpu.iota {dimensions = array<i32: 1>} : vector<8x128xi32>
    %7 = vector.broadcast %5 : vector<8x1xi32> to vector<8x128xi32>
    %8 = arith.cmpi eq, %6, %7 : vector<8x128xi32>
    %9 = arith.extui %8 : vector<8x128xi1> to vector<8x128xi32>
    %10 = arith.sitofp %9 : vector<8x128xi32> to vector<8x128xf32>
    %c0_2 = arith.constant 0 : index
    %c0_3 = arith.constant 0 : index
    %11 = vector.load %arg4[%c0_2, %c0_3] : memref<128x128xf32, #tpu.memory_space<vmem>>, vector<128x128xf32>
    %cst = arith.constant dense<0.000000e+00> : vector<8x128xf32>
    %12 = tpu.matmul %10, %11, %cst {dimension_numbers = #tpu.dot_dimension_numbers<[1], [0], [0], [1], [0, 0, 1, 1], [], []>} : vector<8x128xf32>, vector<128x128xf32>, vector<8x128xf32> -> vector<8x128xf32>
    %c0_4 = arith.constant 0 : index
    %c0_5 = arith.constant 0 : index
    %13 = vector.load %arg3[%c0_4, %c0_5] : memref<8x128xf32, #tpu.memory_space<vmem>>, vector<8x128xf32>
    %14 = arith.addf %12, %13 : vector<8x128xf32>
    %15 = vector.shape_cast %14 : vector<8x128xf32> to vector<1x8x128xf32>
    %c0_6 = arith.constant 0 : index
    %c0_7 = arith.constant 0 : index
    %c0_8 = arith.constant 0 : index
    %16 = vector.load %arg5[%c0_6, %c0_7, %c0_8] : memref<1x8x128xf32, #tpu.memory_space<vmem>>, vector<1x8x128xf32>
    tpu.vector_store %arg5[%c0_6, %c0_7, %c0_8], %15 {strides = array<i32>} : memref<1x8x128xf32, #tpu.memory_space<vmem>>, vector<1x8x128xf32>,
    return
  }
  func.func @transform_0(%arg0: i32, %arg1: i32) -> (i32, i32, i32) {
    %c0_i32 = arith.constant 0 : i32
    %c0_i32_0 = arith.constant 0 : i32
    return %arg1, %arg0, %c0_i32 : i32, i32, i32
  }
  func.func @transform_1(%arg0: i32, %arg1: i32) -> (i32, i32) {
    %c0_i32 = arith.constant 0 : i32
    %c0_i32_0 = arith.constant 0 : i32
    return %arg0, %c0_i32 : i32, i32
  }
  func.func @transform_2(%arg0: i32, %arg1: i32) -> (i32, i32) {
    %c0_i32 = arith.constant 0 : i32
    %c0_i32_0 = arith.constant 0 : i32
    %c0_i32_1 = arith.constant 0 : i32
    return %c0_i32, %c0_i32_0 : i32, i32
  }
  func.func @transform_3(%arg0: i32, %arg1: i32) -> (i32, i32, i32) {
    %c0_i32 = arith.constant 0 : i32
    %c0_i32_0 = arith.constant 0 : i32
    return %arg1, %arg0, %c0_i32 : i32, i32, i32
  }
}

</mosaic_0001>

<llo_original>
// kernel: tpu_custom_call.1
$region0: #{tpu_custom_call.1}
  #allocation0 [shape = 'u32[]', space=smem, size = 0x4, offset = 0x4, fixed_abs, tag = 'smem constant byte address 0x4 - core index']
  #allocation1 [shape = 'u32[144,128]{1,0:T(1,128)}', space=vmem, size = 0x12000, scoped, tag = 'internal scratch']
  %s0 = inlined_call_operand.vmem [shape: s32[2,8,1], index: 0, kind: input, shape index: {}]
  %s1 = inlined_call_operand.vmem [shape: f32[8,128], index: 1, kind: input, shape index: {}]
  %s2 = inlined_call_operand.hbm [shape: f32[128,128], index: 2, kind: input, shape index: {}]
  %s3 = inlined_call_operand.hbm [shape: f32[2,8,128], index: 3, kind: output, shape index: {}]
  %s4 = sld [smem:[#allocation0]]
  $region49: #{tpu_custom_call.1} parent=0
    _
  %s6 = ssub.s32 1, %s4
  %s7 = scalar_select 0, %s6, %s4
  $region1: #{tpu_custom_call.1} parent=0
    #allocation2 [shape = 'u8[65536]{0}', space=vmem, size = 0x10000, scoped, tag = 'input window, operand 2, single buffered']
    #allocation3 [shape = 's32[2]{0}', space=sflag, size = 0x8, scoped, tag = 'scoped memory for tpu_custom_call.1']
    #allocation4 [shape = 's32[2]{0}', space=sflag, size = 0x8, scoped, tag = 'scoped memory for tpu_custom_call.1']
    #allocation5 [shape = 'u8[8192]{0}', space=vmem, size = 0x2000, scoped, tag = 'output window, operand 0']
    %8 = vsyncpa [#allocation3], 0
    %9 = vsyncpa [#allocation4], 0
    %s10 = scalar_lea.sflag [#allocation4], 1
    %11 = vsyncpa %s10, 0
    loop: start=0, step=1, limit=4
    $region2: #{tpu_custom_call.1} parent=1 // loop_pre_header
      _
    $region3: #{tpu_custom_call.1} parent=1 // loop_header
      %s13 = sphi 0, %s17
      %p14 = scmp.ge.s32.totalorder %s13, 4
      %s20 = sphi 0, %s32
      %s21 = sphi 0, %s28
      %s22 = sphi 0, %s20
      %s23 = sphi 0, %s21
      %s24 = sphi 0, %s22
      %s25 = sphi 0, %s23
      %s37 = sphi 0, %s39
      %s40 = sphi 0, %s37
      %s41 = sphi 0, %s40
      %s57 = sphi 0, %s41
      %s63 = sphi 0, %s65
      %s66 = sphi 0, %s63
      %s67 = sphi 0, %s66
      %s83 = sphi 0, %s67
      %s87 = sphi 0, %s87
      %s89 = sphi 0, %s87
      %s90 = sphi 0, %s89
      %s104 = sphi 0, %s90
      %s112 = sphi 0, %s114
      %s115 = sphi 0, %s112
      %s116 = sphi 0, %s115
      %s132 = sphi 0, %s116
    $region4: #{tpu_custom_call.1} parent=1 // loop_header_branch
      %16 = sbr.rel (%p14) target = $region8
    $region5: #{tpu_custom_call.1} parent=1 // loop_body
      %s18 = ssub.s32 %s13, 1
      %s19 = ssub.s32 %s13, 2
      %s26 = sadd.s32 1, %s21
      %p27 = scmp.ge.s32.totalorder %s26, 2
      %s28 = scalar_select %p27, 0, %s26
      %s29 = sadd.s32 1, %s20
      %s30 = scalar_select %p27, %s29, %s20
      %p31 = scmp.ge.s32.totalorder %s30, 1
      %s32 = scalar_select %p31, 0, %s30
      %s33 = ssub.s32 %s21, %s28
      %s34 = ssub.s32 %s20, %s32
      %s35 = sor.u32 %s33, %s34
      %p36 = scmp.eq.s32.totalorder %s35, 0
      %s38 = sadd.s32 %s37, 1
      %s39 = scalar_select %p36, %s37, %s38
      %p42 = pneg %p36
      %p43 = scmp.eq.s32.totalorder %s13, 1
      %p44 = por %p42, %p43
      %p45 = scmp.ne.s32.totalorder %s37, %s40
      %p46 = scmp.eq.s32.totalorder %s13, 0
      %p47 = por %p45, %p46
      %p48 = scmp.ne.s32.totalorder %s37, %s40
      %p49 = scmp.eq.s32.totalorder %s18, 1
      %p50 = por %p48, %p49
      %p51 = scmp.ne.s32.totalorder %s40, %s41
      %p52 = scmp.eq.s32.totalorder %s18, 0
      %p53 = por %p51, %p52
      %p54 = scmp.ne.s32.totalorder %s40, %s41
      %p55 = scmp.eq.s32.totalorder %s19, 1
      %p56 = por %p54, %p55
      %p58 = scmp.ne.s32.totalorder %s41, %s57
      %p59 = scmp.eq.s32.totalorder %s19, 0
      %p60 = por %p58, %p59
      %s61 = ssub.s32 %s20, %s32
      %p62 = scmp.eq.s32.totalorder %s61, 0
      %s64 = sadd.s32 %s63, 1
      %s65 = scalar_select %p62, %s63, %s64
      %p68 = pneg %p62
      %p69 = scmp.eq.s32.totalorder %s13, 1
      %p70 = por %p68, %p69
      %p71 = scmp.ne.s32.totalorder %s63, %s66
      %p72 = scmp.eq.s32.totalorder %s13, 0
      %p73 = por %p71, %p72
      %p74 = scmp.ne.s32.totalorder %s63, %s66
      %p75 = scmp.eq.s32.totalorder %s18, 1
      %p76 = por %p74, %p75
      %p77 = scmp.ne.s32.totalorder %s66, %s67
      %p78 = scmp.eq.s32.totalorder %s18, 0
      %p79 = por %p77, %p78
      %p80 = scmp.ne.s32.totalorder %s66, %s67
      %p81 = scmp.eq.s32.totalorder %s19, 1
      %p82 = por %p80, %p81
      %p84 = scmp.ne.s32.totalorder %s67, %s83
      %p85 = scmp.eq.s32.totalorder %s19, 0
      %p86 = por %p84, %p85
      %s88 = sadd.s32 %s87, 1
      %p91 = scmp.eq.s32.totalorder %s13, 1
      %p92 = scmp.ne.s32.totalorder %s87, %s89
      %p93 = scmp.eq.s32.totalorder %s13, 0
      %p94 = por %p92, %p93
      %p95 = scmp.ne.s32.totalorder %s87, %s89
      %p96 = scmp.eq.s32.totalorder %s18, 1
      %p97 = por %p95, %p96
      %p98 = scmp.ne.s32.totalorder %s89, %s90
      %p99 = scmp.eq.s32.totalorder %s18, 0
      %p100 = por %p98, %p99
      %p101 = scmp.ne.s32.totalorder %s89, %s90
      %p102 = scmp.eq.s32.totalorder %s19, 1
      %p103 = por %p101, %p102
      %p105 = scmp.ne.s32.totalorder %s90, %s104
      %p106 = scmp.eq.s32.totalorder %s19, 0
      %p107 = por %p105, %p106
      %s108 = ssub.s32 %s21, %s28
      %s109 = ssub.s32 %s20, %s32
      %s110 = sor.u32 %s108, %s109
      %p111 = scmp.eq.s32.totalorder %s110, 0
      %s113 = sadd.s32 %s112, 1
      %s114 = scalar_select %p111, %s112, %s113
      %p117 = pneg %p111
      %p118 = scmp.eq.s32.totalorder %s13, 1
      %p119 = por %p117, %p118
      %p120 = scmp.ne.s32.totalorder %s112, %s115
      %p121 = scmp.eq.s32.totalorder %s13, 0
      %p122 = por %p120, %p121
      %p123 = scmp.ne.s32.totalorder %s112, %s115
      %p124 = scmp.eq.s32.totalorder %s18, 1
      %p125 = por %p123, %p124
      %p126 = scmp.ne.s32.totalorder %s115, %s116
      %p127 = scmp.eq.s32.totalorder %s18, 0
      %p128 = por %p126, %p127
      %p129 = scmp.ne.s32.totalorder %s115, %s116
      %p130 = scmp.eq.s32.totalorder %s19, 1
      %p131 = por %p129, %p130
      %p133 = scmp.ne.s32.totalorder %s116, %s132
      %p134 = scmp.eq.s32.totalorder %s19, 0
      %p135 = por %p133, %p134
      %p136 = scmp.le.s32.totalorder 1, %s13
      %p137 = scmp.lt.s32.totalorder %s13, 3
      %p138 = pnand %p136, %p137
      %p139 = pneg %p138
      // Predicated region
      $region9: #{tpu_custom_call.1} parent=5 // pred_check
        _
      $region10: #{tpu_custom_call.1} parent=5 // pred_check_branch
        %141 = sbr.rel (%p138) target = $region12
      $region11: #{tpu_custom_call.1} parent=5 // pred_region
        %s142 = ssub.s32 %s13, 1
        // Predicated region
        $region13: #{tpu_custom_call.1} parent=11 // pred_check
          %p143 = pneg %p79
        $region14: #{tpu_custom_call.1} parent=11 // pred_check_branch
          %145 = sbr.rel (%p143) target = $region16
        $region15: #{tpu_custom_call.1} parent=11 // pred_region
          %p146 = scmp.lt.s32.totalorder %s22, 0
          %s147 = scalar_select %p146, %s22, 0
          %s148 = smul.addr %s147, 8
          %s149 = scalar_lea.vmem %s1, %s148
        $region16: #{tpu_custom_call.1} parent=11 // pred_fallthru
          _
        // Predicated region
        $region17: #{tpu_custom_call.1} parent=11 // pred_check
          %p150 = pneg %p100
        $region18: #{tpu_custom_call.1} parent=11 // pred_check_branch
          %152 = sbr.rel (%p150) target = $region20
        $region19: #{tpu_custom_call.1} parent=11 // pred_region
          %s154 = ssub.s32 2048, 2048
          %155 = vsyncadd [#allocation3], %s154
          %s156 = sshll.u32 [#allocation2], 4
          %s157 = int_to_ptr.vmem [resolvable:$true] %s156
          %162 = dma.hbm_to_vmem [thread:$0]  %s2, 2048, %s157, [#allocation3], 128, 128, 8
        $region20: #{tpu_custom_call.1} parent=11 // pred_fallthru
          _
      $region12: #{tpu_custom_call.1} parent=5 // pred_fallthru
        _
      %p163 = scmp.lt.s32.totalorder %s13, 2
      // Predicated region
      $region21: #{tpu_custom_call.1} parent=5 // pred_check
        %p164 = pneg %p163
      $region22: #{tpu_custom_call.1} parent=5 // pred_check_branch
        %166 = sbr.rel (%p164) target = $region24
      $region23: #{tpu_custom_call.1} parent=5 // pred_region
        // Predicated region
        $region25: #{tpu_custom_call.1} parent=23 // pred_check
          %p167 = pneg %p47
        $region26: #{tpu_custom_call.1} parent=23 // pred_check_branch
          %169 = sbr.rel (%p167) target = $region28
        $region27: #{tpu_custom_call.1} parent=23 // pred_region
          %p170 = scmp.lt.s32.totalorder %s21, 1
          %s171 = scalar_select %p170, %s21, 1
          %p172 = scmp.lt.s32.totalorder %s20, 0
          %s173 = scalar_select %p172, %s20, 0
          %s174 = sadd.s32 %s173, %s171
          %s175 = smul.addr %s174, 8
          %s176 = scalar_lea.vmem %s0, %s175
        $region28: #{tpu_custom_call.1} parent=23 // pred_fallthru
          _
      $region24: #{tpu_custom_call.1} parent=5 // pred_fallthru
        _
      %p177 = scmp.le.s32.totalorder 1, %s13
      %p178 = scmp.lt.s32.totalorder %s13, 3
      %p179 = pnand %p177, %p178
      %p180 = pneg %p179
      // Predicated region
      $region29: #{tpu_custom_call.1} parent=5 // pred_check
        _
      $region30: #{tpu_custom_call.1} parent=5 // pred_check_branch
        %182 = sbr.rel (%p179) target = $region32
      $region31: #{tpu_custom_call.1} parent=5 // pred_region
        %s183 = ssub.s32 %s13, 1
        // Predicated region
        $region33: #{tpu_custom_call.1} parent=31 // pred_check
          %p184 = pneg %p100
        $region34: #{tpu_custom_call.1} parent=31 // pred_check_branch
          %186 = sbr.rel (%p184) target = $region36
        $region35: #{tpu_custom_call.1} parent=31 // pred_region
          %187 = dma.done [#allocation3], 2048
        $region36: #{tpu_custom_call.1} parent=31 // pred_fallthru
          _
        %p188 = scmp.lt.s32.totalorder %s23, 1
        %s189 = scalar_select %p188, %s23, 1
        %p190 = scmp.lt.s32.totalorder %s22, 0
        %s191 = scalar_select %p190, %s22, 0
        %s192 = sadd.s32 %s191, %s189
        %s193 = smul.addr %s192, 8
        %s194 = scalar_lea.vmem %s0, %s193
        %p195 = pneg %p53
        %p196 = pneg %p50
        %p197 = scmp.lt.s32.totalorder %s22, 0
        %s198 = scalar_select %p197, %s22, 0
        %s199 = smul.addr %s198, 8
        %s200 = scalar_lea.vmem %s1, %s199
        %p201 = pneg %p79
        %p202 = pneg %p76
        %p203 = pneg %p100
        %p204 = pneg %p97
        %p205 = pneg %p128
        %p206 = pneg %p125
        %s207 = sand.u32 %s115, 1
        %s208 = scalar_lea.sflag [#allocation4], %s207
        %s209 = sand.u32 %s115, 1
        %s210 = smul.addr %s209, 8
        %s211 = scalar_lea.vmem [#allocation5], %s210
        %p212 = scmp.lt.s32.totalorder %s23, 1
        %s213 = scalar_select %p212, %s23, 1
        %p214 = scmp.lt.s32.totalorder %s22, 0
        %s215 = scalar_select %p214, %s22, 0
        %s216 = sadd.s32 %s215, %s213
        %s217 = smul.addr %s216, 8
        %s218 = scalar_lea.vmem %s0, %s217
        %p219 = scmp.lt.s32.totalorder %s22, 0
        %s220 = scalar_select %p219, %s22, 0
        %s221 = smul.addr %s220, 8
        %s222 = scalar_lea.vmem %s1, %s221
        %v223 = vld [vmem:[%s218] sm:$0xff]
        %vm224 = vcmp.gt.s32.totalorder %v223, 0
        %v225 = vsel %vm224, %v223, 0
        %vm226 = vcmp.lt.s32.totalorder %v225, 63
        %v227 = vsel %vm226, %v225, 63
        %v228 = vlaneseq
        %v229 = vand.u32 %v228, 127
        %230 = vset.pattern.permute.xlu0 0
        %231 = vperm.xlu0 %230, %v227
        %v232 = vpop.permute.xlu0 %231
        %vm233 = vcmp.eq.s32.totalorder %v229, %v232
        %v234 = vsel %vm233, 1, 0
        %v235 = vcvt.s32.f32 %v234
        %v236 = vld [vmem:[#allocation2] sm:$0xff]
        %v237 = vld [vmem:[#allocation2 + $0x8] sm:$0xff]
        %v238 = vld [vmem:[#allocation2 + $0x10] sm:$0xff]
        %v239 = vld [vmem:[#allocation2 + $0x18] sm:$0xff]
        %v240 = vld [vmem:[#allocation2 + $0x20] sm:$0xff]
        %v241 = vld [vmem:[#allocation2 + $0x28] sm:$0xff]
        %v242 = vld [vmem:[#allocation2 + $0x30] sm:$0xff]
        %v243 = vld [vmem:[#allocation2 + $0x38] sm:$0xff]
        %v244 = vld [vmem:[#allocation2 + $0x40] sm:$0xff]
        %v245 = vld [vmem:[#allocation2 + $0x48] sm:$0xff]
        %v246 = vld [vmem:[#allocation2 + $0x50] sm:$0xff]
        %v247 = vld [vmem:[#allocation2 + $0x58] sm:$0xff]
        %v248 = vld [vmem:[#allocation2 + $0x60] sm:$0xff]
        %v249 = vld [vmem:[#allocation2 + $0x68] sm:$0xff]
        %v250 = vld [vmem:[#allocation2 + $0x70] sm:$0xff]
        %v251 = vld [vmem:[#allocation2 + $0x78] sm:$0xff]
        %v252 = vld [vmem:[%s222] sm:$0xff]
        %253 = vmatprep.subr.mxu0 0.0
        %254 = vmatpush1.msra.mxu0 %v251
        %255 = vmatprep.subr.mxu0 0.0
        %256 = vmatpush1.msra.mxu0 %v250
        %257 = vmatprep.subr.mxu0 0.0
        %258 = vmatpush1.msra.mxu0 %v249
        %259 = vmatprep.subr.mxu0 0.0
        %260 = vmatpush1.msra.mxu0 %v248
        %261 = vmatprep.subr.mxu0 0.0
        %262 = vmatpush1.msra.mxu0 %v247
        %263 = vmatprep.subr.mxu0 0.0
        %264 = vmatpush1.msra.mxu0 %v246
        %265 = vmatprep.subr.mxu0 0.0
        %266 = vmatpush1.msra.mxu0 %v245
        %267 = vmatprep.subr.mxu0 0.0
        %268 = vmatpush1.msra.mxu0 %v244
        %269 = vmatprep.subr.mxu0 0.0
        %270 = vmatpush1.msra.mxu0 %v243
        %271 = vmatprep.subr.mxu0 0.0
        %272 = vmatpush1.msra.mxu0 %v242
        %273 = vmatprep.subr.mxu0 0.0
        %274 = vmatpush1.msra.mxu0 %v241
        %275 = vmatprep.subr.mxu0 0.0
        %276 = vmatpush1.msra.mxu0 %v240
        %277 = vmatprep.subr.mxu0 0.0
        %278 = vmatpush1.msra.mxu0 %v239
        %279 = vmatprep.subr.mxu0 0.0
        %280 = vmatpush1.msra.mxu0 %v238
        %281 = vmatprep.subr.mxu0 0.0
        %282 = vmatpush1.msra.mxu0 %v237
        %283 = vmatprep.subr.mxu0 0.0
        %284 = vmatpush1.msra.mxu0 %v236
        %285 = vmatprep.subr.mxu0 0.0
        %286 = vmatpush2.msra.mxu0 0.0
        %287 = vmatprep.subr.mxu0 0.0
        %288 = vmatpush2.msra.mxu0 0.0
        %289 = vmatprep.subr.mxu0 0.0
        %290 = vmatpush2.msra.mxu0 0.0
        %291 = vmatprep.subr.mxu0 0.0
        %292 = vmatpush2.msra.mxu0 0.0
        %293 = vmatprep.subr.mxu0 0.0
        %294 = vmatpush2.msra.mxu0 0.0
        %295 = vmatprep.subr.mxu0 0.0
        %296 = vmatpush2.msra.mxu0 0.0
        %297 = vmatprep.subr.mxu0 0.0
        %298 = vmatpush2.msra.mxu0 0.0
        %299 = vmatprep.subr.mxu0 0.0
        %300 = vmatpush2.msra.mxu0 0.0
        %301 = vmatprep.subr.mxu0 0.0
        %302 = vmatpush2.msra.mxu0 0.0
        %303 = vmatprep.subr.mxu0 0.0
        %304 = vmatpush2.msra.mxu0 0.0
        %305 = vmatprep.subr.mxu0 0.0
        %306 = vmatpush2.msra.mxu0 0.0
        %307 = vmatprep.subr.mxu0 0.0
        %308 = vmatpush2.msra.mxu0 0.0
        %309 = vmatprep.subr.mxu0 0.0
        %310 = vmatpush2.msra.mxu0 0.0
        %311 = vmatprep.subr.mxu0 0.0
        %312 = vmatpush2.msra.mxu0 0.0
        %313 = vmatprep.subr.mxu0 0.0
        %314 = vmatpush2.msra.mxu0 0.0
        %315 = vmatprep.subr.mxu0 0.0
        %316 = vmatpush2.msra.mxu0 0.0
        %317 = vmatprep.mubr.f32.mxu0 0.0
        %318 = vmatmul.mubr.f32.gmra.mxu0 %v235
        %v319 = vpop.f32.mrf.mxu0
        %v320 = vadd.f32 %v252, %v319
        %v321 = vpop.f32.mrf.mxu0
        %322 = vdwg.mxu0
        %323 = vst [vmem:[%s211] sm:$0xff] %v320
        %s324 = sand.u32 %s115, 1
        %s325 = scalar_lea.sflag [#allocation4], %s324
        %s326 = sand.u32 %s115, 1
        %s327 = smul.addr %s326, 8
        %s328 = scalar_lea.vmem [#allocation5], %s327
        // Predicated region
        $region37: #{tpu_custom_call.1} parent=31 // pred_check
          %p329 = pneg %p125
        $region38: #{tpu_custom_call.1} parent=31 // pred_check_branch
          %331 = sbr.rel (%p329) target = $region40
        $region39: #{tpu_custom_call.1} parent=31 // pred_region
          %s333 = ssub.s32 128, 128
          %334 = vsyncadd %s325, %s333
          %s335 = sadd.s32 %s22, %s23
          %s336 = smul.addr %s335, 128
          %s337 = scalar_lea.hbm %s3, %s336
          %s339 = sshll.u32 %s328, 4
          %s340 = int_to_ptr.vmem [resolvable:$true] %s339
          %342 = dma.vmem_to_hbm [thread:$0]  %s340, 128, %s337, %s325
        $region40: #{tpu_custom_call.1} parent=31 // pred_fallthru
          _
      $region32: #{tpu_custom_call.1} parent=5 // pred_fallthru
        _
      %p343 = scmp.le.s32.totalorder 2, %s13
      // Predicated region
      $region41: #{tpu_custom_call.1} parent=5 // pred_check
        %p344 = pneg %p343
      $region42: #{tpu_custom_call.1} parent=5 // pred_check_branch
        %346 = sbr.rel (%p344) target = $region44
      $region43: #{tpu_custom_call.1} parent=5 // pred_region
        %s347 = ssub.s32 %s13, 2
        // Predicated region
        $region45: #{tpu_custom_call.1} parent=43 // pred_check
          %p348 = pneg %p131
        $region46: #{tpu_custom_call.1} parent=43 // pred_check_branch
          %350 = sbr.rel (%p348) target = $region48
        $region47: #{tpu_custom_call.1} parent=43 // pred_region
          %s351 = sand.u32 %s116, 1
          %s352 = scalar_lea.sflag [#allocation4], %s351
          %s353 = sand.u32 %s116, 1
          %s354 = smul.addr %s353, 8
          %s355 = scalar_lea.vmem [#allocation5], %s354
          %356 = dma.done %s352, 128
        $region48: #{tpu_custom_call.1} parent=43 // pred_fallthru
          _
      $region44: #{tpu_custom_call.1} parent=5 // pred_fallthru
        _
    $region6: #{tpu_custom_call.1} parent=1 // loop_footer
      %s17 = sadd.s32 1, %s13
    $region7: #{tpu_custom_call.1} parent=1 // loop_footer_branch
      %12 = sbr.rel target = $region3
    $region8: #{tpu_custom_call.1} parent=1 // loop_exit
      _
    %357 = vsyncpa [#allocation3], 1
    %s358 = scalar_lea.sflag [#allocation3], 1
    %359 = vsyncpa %s358, 1
    %360 = vsyncpa [#allocation4], 1
    %s361 = scalar_lea.sflag [#allocation4], 1
    %362 = vsyncpa %s361, 1

</llo_original>
